<compile_context>
chip_gen: v5e
topology: v5e:2x2
jax: 0.10.0
libtpu: 0.0.40
codegen_flags: <defaults>
</compile_context>

<pallas_src>
import math

import jax
import jax.numpy as jnp
from jax.experimental import pallas as pl
from jax.experimental.pallas import tpu as pltpu

# Static conv hyper-parameters of the representative Aeris RND predictor.
KERNEL_SIZE = 8
STRIDE = 4
PADDING = 2
LANES = 128          # lane-dense slab width (holds pred[0:h1] and err at lane h1)


def _cdiv(a, b):
    return -(-a // b)


# ----------------------------- Pallas kernel -------------------------------

def make_kernel(fin_p, h1):
    """Whole forward pass, VMEM resident.  All activations are 128-lane dense.

    x (TB, fin_p) --conv-as-dense+ReLU--> h (TB,128) --Linear--> p (TB,128)
      p lanes [0,h1) = predicted_state, lane h1 = b3 (folded bias), rest 0.
    metacritic: ReLU, Linear, ReLU, Linear, ReLU  (all 128-lane, zero-padded),
    final Linear(h1->1) as a VPU/XLU reduce, written into lane h1 of the slab.
    """
    o0, o1, o2, o3 = fin_p, fin_p + LANES, fin_p + 2 * LANES, fin_p + 3 * LANES

    def kernel(x_ref, w_ref, v_ref, out_ref):
        x = x_ref[...]
        # rnd_model: Conv1d (pre-folded to dense) + ReLU
        h = jnp.maximum(
            jnp.dot(x, w_ref[0:o0, :], preferred_element_type=jnp.float32)
            + v_ref[0:1, :], 0.0)
        # rnd_model: Flatten + Linear -> predicted_state, already packed in lanes [0,h1)
        p = (jnp.dot(h, w_ref[o0:o1, :], preferred_element_type=jnp.float32)
             + v_ref[1:2, :])
        # metacritic head: ReLU, Linear, ReLU, Linear, ReLU
        y = jnp.maximum(p, 0.0)
        y = jnp.maximum(
            jnp.dot(y, w_ref[o1:o2, :], preferred_element_type=jnp.float32)
            + v_ref[2:3, :], 0.0)
        y = jnp.maximum(
            jnp.dot(y, w_ref[o2:o3, :], preferred_element_type=jnp.float32)
            + v_ref[3:4, :], 0.0)
        # final Linear(h1 -> 1): VPU mul + cross-lane sum (off the MXU chain);
        # its bias is already sitting in p[:, h1] (folded at fuse time).
        err = jnp.sum(y * v_ref[4:5, :], axis=-1, keepdims=True)
        lane = jax.lax.broadcasted_iota(jnp.int32, p.shape, 1)
        out_ref[...] = p + jnp.where(lane == h1, err, 0.0)

    return kernel


# ------------------------------- wrapper ------------------------------------

def metacritic_rnd_forward(state, fp):
    """forward(state) -> (predicted_state, error_estimate)."""
    B = state.shape[0]
    h1, fin_p = fp["h1"], fp["fin_p"]
    x = state.reshape(B, -1).astype(jnp.float32)      # (B, C*W): contiguous, free.
    cw = x.shape[1]

    # Batch hygiene: pad rows to a multiple of 8 (sublane) and tile the batch
    # so large B runs as a parallel grid (2 TCs on v7x); pad lanes to fin_p.
    b8 = 8 * _cdiv(B, 8)
    tb = min(512, b8)                                  # f32 tiles stay << v7x VMEM
    bp = tb * _cdiv(b8, tb)
    x_p = jnp.pad(x, ((0, bp - B), (0, fin_p - cw)))

    slab = pl.pallas_call(
        make_kernel(fin_p, h1),
        out_shape=jax.ShapeDtypeStruct((bp, LANES), jnp.float32),
        grid_spec=pltpu.PrefetchScalarGridSpec(
            num_scalar_prefetch=0,
            grid=(bp // tb,),
            in_specs=[
                pl.BlockSpec((tb, fin_p), lambda i: (i, 0)),
                pl.BlockSpec(fp["w_slab"].shape, lambda i: (0, 0)),   # weights resident
                pl.BlockSpec(fp["v_slab"].shape, lambda i: (0, 0)),   # biases resident
            ],
            out_specs=pl.BlockSpec((tb, LANES), lambda i: (i, 0)),
        ),
        compiler_params=pltpu.CompilerParams(dimension_semantics=("parallel",)),
    )(x_p, fp["w_slab"], fp["v_slab"])

    predicted_state = slab[:B, :h1]
    error_estimate = slab[:B, h1:h1 + 1]
    return predicted_state, error_estimate


# --------------------------- parameter creation -----------------------------

def _orthogonal(key, out_dim, in_dim, gain):
    """torch.nn.init.orthogonal_ equivalent; returns torch layout (out, in)."""
    n = max(out_dim, in_dim)
    a = jax.random.normal(key, (n, n), dtype=jnp.float32)
    q, r = jnp.linalg.qr(a)
    q = q * jnp.sign(jnp.diag(r))
    return (q[:out_dim, :in_dim] * gain).astype(jnp.float32)


def make_torch_params(key, channels, width, filters, h1):
    """Parameters in PyTorch layout (Linear/Conv weights are (out, in[, k]))."""
    wo = (width + 2 * PADDING - KERNEL_SIZE) // STRIDE + 1
    fc_in = filters * wo
    ks = jax.random.split(key, 7)
    gain = math.sqrt(2.0)
    return {
        # representative RND predictor (deterministic synthetic init)
        "conv_w": 0.1 * jax.random.normal(ks[0], (filters, channels, KERNEL_SIZE),
                                          dtype=jnp.float32),
        "conv_b": 0.01 * jax.random.normal(ks[1], (filters,), dtype=jnp.float32),
        "fc0_w": 0.1 * jax.random.normal(ks[2], (h1, fc_in), dtype=jnp.float32),
        "fc0_b": 0.01 * jax.random.normal(ks[3], (h1,), dtype=jnp.float32),
        # metacritic head: orthogonal(gain=sqrt(2)), zero bias (module._init)
        "mc1_w": _orthogonal(ks[4], h1, h1, gain),
        "mc1_b": jnp.zeros((h1,), jnp.float32),
        "mc2_w": _orthogonal(ks[5], h1, h1, gain),
        "mc2_b": jnp.zeros((h1,), jnp.float32),
        "mc3_w": _orthogonal(ks[6], 1, h1, gain),
        "mc3_b": jnp.zeros((1,), jnp.float32),
    }


def fuse_params(tp, channels, width, filters, h1):
    """Fold conv padding / im2col / Flatten / output packing into two slabs."""
    wo = (width + 2 * PADDING - KERNEL_SIZE) // STRIDE + 1
    fc_in = filters * wo
    cw = channels * width
    assert fc_in <= LANES and h1 + 1 <= LANES, "feature dims must fit one lane tile"
    fin_p = LANES * _cdiv(cw, LANES)

    # ---- Conv1d -> dense.  M[c*W+x, f*Wo+w] = Wt[f,c, x - w*S + P] (0 outside) ----
    # Column order f*Wo+w matches torch's Flatten of (B, F, Wo), so fc0_w.T
    # needs no row permutation.
    x_idx = jnp.arange(width)
    w_idx = jnp.arange(wo)
    k = x_idx[:, None] - w_idx[None, :] * STRIDE + PADDING            # (W, Wo)
    valid = ((k >= 0) & (k < KERNEL_SIZE)).astype(jnp.float32)
    kc = jnp.clip(k, 0, KERNEL_SIZE - 1)
    g = tp["conv_w"][:, :, kc] * valid[None, None, :, :]              # (F, C, W, Wo)
    m = jnp.transpose(g, (1, 2, 0, 3)).reshape(cw, fc_in)
    wc = jnp.zeros((fin_p, LANES), jnp.float32).at[:cw, :fc_in].set(m)
    bc = jnp.zeros((LANES,), jnp.float32).at[:fc_in].set(jnp.repeat(tp["conv_b"], wo))

    # ---- fc0 packed lane-dense: cols [0,h1) real weights, rest 0.
    #      Final metacritic bias b3 folded into lane h1 of its bias row. ----
    w0 = jnp.zeros((LANES, LANES), jnp.float32).at[:fc_in, :h1].set(tp["fc0_w"].T)
    b0 = (jnp.zeros((LANES,), jnp.float32)
          .at[:h1].set(tp["fc0_b"])
          .at[h1].set(tp["mc3_b"][0]))

    # ---- metacritic hidden layers, zero-padded to 128x128 ----
    w1 = jnp.zeros((LANES, LANES), jnp.float32).at[:h1, :h1].set(tp["mc1_w"].T)
    b1 = jnp.zeros((LANES,), jnp.float32).at[:h1].set(tp["mc1_b"])
    w2 = jnp.zeros((LANES, LANES), jnp.float32).at[:h1, :h1].set(tp["mc2_w"].T)
    b2 = jnp.zeros((LANES,), jnp.float32).at[:h1].set(tp["mc2_b"])
    w3row = jnp.zeros((LANES,), jnp.float32).at[:h1].set(tp["mc3_w"][0])

    # ---- two DMA operands: one weight slab + one (8,128) vector slab ----
    w_slab = jnp.concatenate([wc, w0, w1, w2], axis=0)                # (fin_p+384, 128)
    v_slab = (jnp.zeros((8, LANES), jnp.float32)
              .at[0].set(bc).at[1].set(b0).at[2].set(b1).at[3].set(b2).at[4].set(w3row))

    return dict(w_slab=w_slab, v_slab=v_slab, h1=h1, fin_p=fin_p)


# ------------------------ pure-JAX reference (torch math) -------------------

def reference_forward(state, tp):
    B, C, Wd = state.shape
    F, _, K = tp["conv_w"].shape
    wo = (Wd + 2 * PADDING - K) // STRIDE + 1
    padded = jnp.pad(state, ((0, 0), (0, 0), (PADDING, PADDING)))
    idx = jnp.arange(wo)[:, None] * STRIDE + jnp.arange(K)[None, :]
    patches = padded[:, :, idx]                                       # (B, C, Wo, K)
    conv = (jnp.einsum("bcwk,fck->bfw", patches, tp["conv_w"])
            + tp["conv_b"][None, :, None])
    flat = jnp.maximum(conv, 0.0).reshape(B, F * wo)                  # torch Flatten (NCW)
    pred = flat @ tp["fc0_w"].T + tp["fc0_b"]
    y = jnp.maximum(pred, 0.0)
    y = jnp.maximum(y @ tp["mc1_w"].T + tp["mc1_b"], 0.0)
    y = jnp.maximum(y @ tp["mc2_w"].T + tp["mc2_b"], 0.0)
    err = y @ tp["mc3_w"].T + tp["mc3_b"]
    return pred, err


# ----------------------------------- main -----------------------------------

if __name__ == "__main__":
    B, C, W = 2, 4, 16            # Aeris 1-D observation: (batch, channels, width)
    FILTERS = 8
    H1 = 32                       # config.metacritic_h1 == rnd predictor output dim

    key = jax.random.PRNGKey(0)
    k_state, k_params = jax.random.split(key)
    state = jax.random.normal(k_state, (B, C, W), dtype=jnp.float32)

    torch_params = make_torch_params(k_params, C, W, FILTERS, H1)
    fused_params = fuse_params(torch_params, C, W, FILTERS, H1)

    fwd = jax.jit(lambda s: metacritic_rnd_forward(s, fused_params))
    predicted_state, error_estimate = fwd(state)
    jax.block_until_ready((predicted_state, error_estimate))

    assert predicted_state.shape == (B, H1)
    assert error_estimate.shape == (B, 1)
    assert predicted_state.dtype == jnp.float32
    assert error_estimate.dtype == jnp.float32

    # Numerical check against a pure-JAX reference of the PyTorch math.
    pred_ref, err_ref = reference_forward(state, torch_params)
    assert bool(jnp.allclose(predicted_state, pred_ref, atol=2e-2, rtol=2e-2))
    assert bool(jnp.allclose(error_estimate, err_ref, atol=2e-2, rtol=2e-2))

    print("KERNEL_OK")
</pallas_src>

<mosaic_0001>
module attributes {stable_mosaic.version = 11 : i64} {
  func.func @kernel(%arg0: i32, %arg1: memref<8x128xf32, #tpu.memory_space<vmem>>, %arg2: memref<512x128xf32, #tpu.memory_space<vmem>>, %arg3: memref<8x128xf32, #tpu.memory_space<vmem>>, %arg4: memref<8x128xf32, #tpu.memory_space<vmem>>) attributes {dimension_semantics = [#tpu.dimension_semantics<parallel>], iteration_bounds = array<i64: 1>, scalar_prefetch = 0 : i64, scratch_operands = 0 : i64, tpu.core_type = #tpu.core_type<tc>, window_params = [{transform_indices = @transform_0, window_bounds = array<i64: 8, 128>}, {pipeline_mode = #tpu.pipeline_mode<synchronous>, transform_indices = @transform_1, window_bounds = array<i64: 512, 128>}, {pipeline_mode = #tpu.pipeline_mode<synchronous>, transform_indices = @transform_2, window_bounds = array<i64: 8, 128>}, {transform_indices = @transform_3, window_bounds = array<i64: 8, 128>}]} {
    %c0 = arith.constant 0 : index
    %c0_0 = arith.constant 0 : index
    %0 = vector.load %arg1[%c0, %c0_0] : memref<8x128xf32, #tpu.memory_space<vmem>>, vector<8x128xf32>
    %c0_1 = arith.constant 0 : index
    %c0_2 = arith.constant 0 : index
    %1 = vector.load %arg2[%c0_1, %c0_2] : memref<512x128xf32, #tpu.memory_space<vmem>>, vector<128x128xf32>
    %cst = arith.constant dense<0.000000e+00> : vector<8x128xf32>
    %2 = tpu.matmul %0, %1, %cst {dimension_numbers = #tpu.dot_dimension_numbers<[1], [0], [0], [1], [0, 0, 1, 1], [], []>} : vector<8x128xf32>, vector<128x128xf32>, vector<8x128xf32> -> vector<8x128xf32>
    %c0_3 = arith.constant 0 : index
    %c0_4 = arith.constant 0 : index
    %3 = vector.load %arg3[%c0_3, %c0_4] : memref<8x128xf32, #tpu.memory_space<vmem>>, vector<1x128xf32>
    %4 = vector.broadcast %3 : vector<1x128xf32> to vector<8x128xf32>
    %5 = arith.addf %2, %4 : vector<8x128xf32>
    %cst_5 = arith.constant 0.000000e+00 : f32
    %6 = vector.broadcast %cst_5 : f32 to vector<8x128xf32>
    %7 = arith.maximumf %5, %6 : vector<8x128xf32>
    %c128 = arith.constant 128 : index
    %c0_6 = arith.constant 0 : index
    %8 = vector.load %arg2[%c128, %c0_6] : memref<512x128xf32, #tpu.memory_space<vmem>>, vector<128x128xf32>
    %cst_7 = arith.constant dense<0.000000e+00> : vector<8x128xf32>
    %9 = tpu.matmul %7, %8, %cst_7 {dimension_numbers = #tpu.dot_dimension_numbers<[1], [0], [0], [1], [0, 0, 1, 1], [], []>} : vector<8x128xf32>, vector<128x128xf32>, vector<8x128xf32> -> vector<8x128xf32>
    %c1 = arith.constant 1 : index
    %c0_8 = arith.constant 0 : index
    %10 = vector.load %arg3[%c1, %c0_8] : memref<8x128xf32, #tpu.memory_space<vmem>>, vector<1x128xf32>
    %11 = vector.broadcast %10 : vector<1x128xf32> to vector<8x128xf32>
    %12 = arith.addf %9, %11 : vector<8x128xf32>
    %cst_9 = arith.constant 0.000000e+00 : f32
    %13 = vector.broadcast %cst_9 : f32 to vector<8x128xf32>
    %14 = arith.maximumf %12, %13 : vector<8x128xf32>
    %c256 = arith.constant 256 : index
    %c0_10 = arith.constant 0 : index
    %15 = vector.load %arg2[%c256, %c0_10] : memref<512x128xf32, #tpu.memory_space<vmem>>, vector<128x128xf32>
    %cst_11 = arith.constant dense<0.000000e+00> : vector<8x128xf32>
    %16 = tpu.matmul %14, %15, %cst_11 {dimension_numbers = #tpu.dot_dimension_numbers<[1], [0], [0], [1], [0, 0, 1, 1], [], []>} : vector<8x128xf32>, vector<128x128xf32>, vector<8x128xf32> -> vector<8x128xf32>
    %c2 = arith.constant 2 : index
    %c0_12 = arith.constant 0 : index
    %17 = vector.load %arg3[%c2, %c0_12] : memref<8x128xf32, #tpu.memory_space<vmem>>, vector<1x128xf32>
    %18 = vector.broadcast %17 : vector<1x128xf32> to vector<8x128xf32>
    %19 = arith.addf %16, %18 : vector<8x128xf32>
    %cst_13 = arith.constant 0.000000e+00 : f32
    %20 = vector.broadcast %cst_13 : f32 to vector<8x128xf32>
    %21 = arith.maximumf %19, %20 : vector<8x128xf32>
    %c384 = arith.constant 384 : index
    %c0_14 = arith.constant 0 : index
    %22 = vector.load %arg2[%c384, %c0_14] : memref<512x128xf32, #tpu.memory_space<vmem>>, vector<128x128xf32>
    %cst_15 = arith.constant dense<0.000000e+00> : vector<8x128xf32>
    %23 = tpu.matmul %21, %22, %cst_15 {dimension_numbers = #tpu.dot_dimension_numbers<[1], [0], [0], [1], [0, 0, 1, 1], [], []>} : vector<8x128xf32>, vector<128x128xf32>, vector<8x128xf32> -> vector<8x128xf32>
    %c3 = arith.constant 3 : index
    %c0_16 = arith.constant 0 : index
    %24 = vector.load %arg3[%c3, %c0_16] : memref<8x128xf32, #tpu.memory_space<vmem>>, vector<1x128xf32>
    %25 = vector.broadcast %24 : vector<1x128xf32> to vector<8x128xf32>
    %26 = arith.addf %23, %25 : vector<8x128xf32>
    %cst_17 = arith.constant 0.000000e+00 : f32
    %27 = vector.broadcast %cst_17 : f32 to vector<8x128xf32>
    %28 = arith.maximumf %26, %27 : vector<8x128xf32>
    %c4 = arith.constant 4 : index
    %c0_18 = arith.constant 0 : index
    %29 = vector.load %arg3[%c4, %c0_18] : memref<8x128xf32, #tpu.memory_space<vmem>>, vector<1x128xf32>
    %30 = vector.broadcast %29 : vector<1x128xf32> to vector<8x128xf32>
    %31 = arith.mulf %28, %30 : vector<8x128xf32>
    %cst_19 = arith.constant dense<0.000000e+00> : vector<8xf32>
    %32 = vector.multi_reduction <add>, %31, %cst_19 [1] : vector<8x128xf32> to vector<8xf32>
    %33 = vector.shape_cast %32 : vector<8xf32> to vector<8x1xf32>
    %34 = tpu.iota {dimensions = array<i32: 1>} : vector<8x128xi32>
    %c32_i32 = arith.constant 32 : i32
    %35 = vector.broadcast %c32_i32 : i32 to vector<8x128xi32>
    %36 = arith.cmpi eq, %34, %35 : vector<8x128xi32>
    %cst_20 = arith.constant 0.000000e+00 : f32
    %37 = vector.shape_cast %33 : vector<8x1xf32> to vector<8x1xf32>
    %38 = vector.broadcast %37 : vector<8x1xf32> to vector<8x128xf32>
    %39 = vector.broadcast %cst_20 : f32 to vector<8x128xf32>
    %40 = arith.select %36, %38, %39 : vector<8x128xi1>, vector<8x128xf32>
    %41 = arith.addf %12, %40 : vector<8x128xf32>
    %c0_21 = arith.constant 0 : index
    %c0_22 = arith.constant 0 : index
    %42 = vector.load %arg4[%c0_21, %c0_22] : memref<8x128xf32, #tpu.memory_space<vmem>>, vector<8x128xf32>
    tpu.vector_store %arg4[%c0_21, %c0_22], %41 {strides = array<i32>} : memref<8x128xf32, #tpu.memory_space<vmem>>, vector<8x128xf32>,
    return
  }
  func.func @transform_0(%arg0: i32) -> (i32, i32) {
    %c0_i32 = arith.constant 0 : i32
    %c0_i32_0 = arith.constant 0 : i32
    return %arg0, %c0_i32 : i32, i32
  }
  func.func @transform_1(%arg0: i32) -> (i32, i32) {
    %c0_i32 = arith.constant 0 : i32
    %c0_i32_0 = arith.constant 0 : i32
    %c0_i32_1 = arith.constant 0 : i32
    return %c0_i32, %c0_i32_0 : i32, i32
  }
  func.func @transform_2(%arg0: i32) -> (i32, i32) {
    %c0_i32 = arith.constant 0 : i32
    %c0_i32_0 = arith.constant 0 : i32
    %c0_i32_1 = arith.constant 0 : i32
    return %c0_i32, %c0_i32_0 : i32, i32
  }
  func.func @transform_3(%arg0: i32) -> (i32, i32) {
    %c0_i32 = arith.constant 0 : i32
    %c0_i32_0 = arith.constant 0 : i32
    return %arg0, %c0_i32 : i32, i32
  }
}

</mosaic_0001>

<llo_original>
// kernel: _lambda_.1
$region0: #{_lambda_.1}
  #allocation0 [shape = 'u32[]', space=smem, size = 0x4, offset = 0x4, fixed_abs, tag = 'smem constant byte address 0x4 - core index']
  #allocation1 [shape = 'u32[72,128]{1,0:T(1,128)}', space=vmem, size = 0x9000, scoped, tag = 'internal scratch']
  %s0 = inlined_call_operand.vmem [shape: f32[8,128], index: 0, kind: input, shape index: {}]
  %s1 = inlined_call_operand.hbm [shape: f32[512,128], index: 1, kind: input, shape index: {}]
  %s2 = inlined_call_operand.vmem [shape: f32[8,128], index: 2, kind: input, shape index: {}]
  %s3 = inlined_call_operand.vmem [shape: f32[8,128], index: 3, kind: output, shape index: {}]
  %s4 = sld [smem:[#allocation0]]
  $region26: #{_lambda_.1} parent=0
    _
  %s6 = ssub.s32 1, %s4
  %s7 = scalar_select 0, %s6, %s4
  $region1: #{_lambda_.1} parent=0
    #allocation2 [shape = 'u8[262144]{0}', space=vmem, size = 0x40000, scoped, tag = 'input window, operand 1, single buffered']
    #allocation3 [shape = 's32[1]{0}', space=sflag, size = 0x4, scoped, tag = 'scoped memory for _lambda_.1']
    %8 = vsyncpa [#allocation3], 0
    // Predicated region
    $region2: #{_lambda_.1} parent=1 // pred_check
      _
    $region3: #{_lambda_.1} parent=1 // pred_check_branch
      %10 = sbr.rel (0) target = $region5
    $region4: #{_lambda_.1} parent=1 // pred_region
      _
    $region5: #{_lambda_.1} parent=1 // pred_fallthru
      _
    // Predicated region
    $region6: #{_lambda_.1} parent=1 // pred_check
      _
    $region7: #{_lambda_.1} parent=1 // pred_check_branch
      %12 = sbr.rel (0) target = $region9
    $region8: #{_lambda_.1} parent=1 // pred_region
      %14 = vsyncadd [#allocation3], 0
      %s15 = sshll.u32 %s1, 4
      %s16 = int_to_ptr.hbm [resolvable:$true] %s15
      %s17 = sshll.u32 [#allocation2], 4
      %s18 = int_to_ptr.vmem [resolvable:$true] %s17
      %23 = dma.hbm_to_vmem [thread:$0]  %s16, 8192, %s18, [#allocation3], 128, 128, 8
    $region9: #{_lambda_.1} parent=1 // pred_fallthru
      _
    // Predicated region
    $region10: #{_lambda_.1} parent=1 // pred_check
      _
    $region11: #{_lambda_.1} parent=1 // pred_check_branch
      %25 = sbr.rel (0) target = $region13
    $region12: #{_lambda_.1} parent=1 // pred_region
      _
    $region13: #{_lambda_.1} parent=1 // pred_fallthru
      _
    // Predicated region
    $region14: #{_lambda_.1} parent=1 // pred_check
      _
    $region15: #{_lambda_.1} parent=1 // pred_check_branch
      %27 = sbr.rel (0) target = $region17
    $region16: #{_lambda_.1} parent=1 // pred_region
      %29 = dma.done [#allocation3], 8192
    $region17: #{_lambda_.1} parent=1 // pred_fallthru
      _
    %v30 = vld [vmem:[%s0] sm:$0xff]
    %v31 = vld [vmem:[#allocation2] sm:$0xff]
    %v32 = vld [vmem:[#allocation2 + $0x8] sm:$0xff]
    %v33 = vld [vmem:[#allocation2 + $0x10] sm:$0xff]
    %v34 = vld [vmem:[#allocation2 + $0x18] sm:$0xff]
    %v35 = vld [vmem:[#allocation2 + $0x20] sm:$0xff]
    %v36 = vld [vmem:[#allocation2 + $0x28] sm:$0xff]
    %v37 = vld [vmem:[#allocation2 + $0x30] sm:$0xff]
    %v38 = vld [vmem:[#allocation2 + $0x38] sm:$0xff]
    %v39 = vld [vmem:[#allocation2 + $0x40] sm:$0xff]
    %v40 = vld [vmem:[#allocation2 + $0x48] sm:$0xff]
    %v41 = vld [vmem:[#allocation2 + $0x50] sm:$0xff]
    %v42 = vld [vmem:[#allocation2 + $0x58] sm:$0xff]
    %v43 = vld [vmem:[#allocation2 + $0x60] sm:$0xff]
    %v44 = vld [vmem:[#allocation2 + $0x68] sm:$0xff]
    %v45 = vld [vmem:[#allocation2 + $0x70] sm:$0xff]
    %v46 = vld [vmem:[#allocation2 + $0x78] sm:$0xff]
    %v47 = vld [vmem:[%s2] sm:$0x1]
    %v48 = vperm.slane %v47, 0
    %49 = vmatpush.msra.mxu0 %v46
    %50 = vmatpush.msra.mxu0 %v45
    %51 = vmatpush.msra.mxu0 %v44
    %52 = vmatpush.msra.mxu0 %v43
    %53 = vmatpush.msra.mxu0 %v42
    %54 = vmatpush.msra.mxu0 %v41
    %55 = vmatpush.msra.mxu0 %v40
    %56 = vmatpush.msra.mxu0 %v39
    %57 = vmatpush.msra.mxu0 %v38
    %58 = vmatpush.msra.mxu0 %v37
    %59 = vmatpush.msra.mxu0 %v36
    %60 = vmatpush.msra.mxu0 %v35
    %61 = vmatpush.msra.mxu0 %v34
    %62 = vmatpush.msra.mxu0 %v33
    %63 = vmatpush.msra.mxu0 %v32
    %64 = vmatpush.msra.mxu0 %v31
    %65 = vmatmul.f32.gmra.mxu0 %v30
    %v66 = vpop.f32.mrf.mxu0
    %v67 = vadd.f32 %v48, %v66
    %68 = vdwg.mxu0
    %v69 = vmax.f32 %v67, 0.0
    %v70 = vld [vmem:[#allocation2 + $0x80] sm:$0xff]
    %v71 = vld [vmem:[#allocation2 + $0x88] sm:$0xff]
    %v72 = vld [vmem:[#allocation2 + $0x90] sm:$0xff]
    %v73 = vld [vmem:[#allocation2 + $0x98] sm:$0xff]
    %v74 = vld [vmem:[#allocation2 + $0xa0] sm:$0xff]
    %v75 = vld [vmem:[#allocation2 + $0xa8] sm:$0xff]
    %v76 = vld [vmem:[#allocation2 + $0xb0] sm:$0xff]
    %v77 = vld [vmem:[#allocation2 + $0xb8] sm:$0xff]
    %v78 = vld [vmem:[#allocation2 + $0xc0] sm:$0xff]
    %v79 = vld [vmem:[#allocation2 + $0xc8] sm:$0xff]
    %v80 = vld [vmem:[#allocation2 + $0xd0] sm:$0xff]
    %v81 = vld [vmem:[#allocation2 + $0xd8] sm:$0xff]
    %v82 = vld [vmem:[#allocation2 + $0xe0] sm:$0xff]
    %v83 = vld [vmem:[#allocation2 + $0xe8] sm:$0xff]
    %v84 = vld [vmem:[#allocation2 + $0xf0] sm:$0xff]
    %v85 = vld [vmem:[#allocation2 + $0xf8] sm:$0xff]
    %v86 = vld [vmem:[%s2 + $0x1] sm:$0x1]
    %v87 = vperm.slane %v86, 0
    %88 = vmatpush.msra.mxu0 %v85
    %89 = vmatpush.msra.mxu0 %v84
    %90 = vmatpush.msra.mxu0 %v83
    %91 = vmatpush.msra.mxu0 %v82
    %92 = vmatpush.msra.mxu0 %v81
    %93 = vmatpush.msra.mxu0 %v80
    %94 = vmatpush.msra.mxu0 %v79
    %95 = vmatpush.msra.mxu0 %v78
    %96 = vmatpush.msra.mxu0 %v77
    %97 = vmatpush.msra.mxu0 %v76
    %98 = vmatpush.msra.mxu0 %v75
    %99 = vmatpush.msra.mxu0 %v74
    %100 = vmatpush.msra.mxu0 %v73
    %101 = vmatpush.msra.mxu0 %v72
    %102 = vmatpush.msra.mxu0 %v71
    %103 = vmatpush.msra.mxu0 %v70
    %104 = vmatmul.f32.gmra.mxu0 %v69
    %v105 = vpop.f32.mrf.mxu0
    %v106 = vadd.f32 %v87, %v105
    %107 = vdwg.mxu0
    %v108 = vmax.f32 %v106, 0.0
    %v109 = vld [vmem:[#allocation2 + $0x100] sm:$0xff]
    %v110 = vld [vmem:[#allocation2 + $0x108] sm:$0xff]
    %v111 = vld [vmem:[#allocation2 + $0x110] sm:$0xff]
    %v112 = vld [vmem:[#allocation2 + $0x118] sm:$0xff]
    %v113 = vld [vmem:[#allocation2 + $0x120] sm:$0xff]
    %v114 = vld [vmem:[#allocation2 + $0x128] sm:$0xff]
    %v115 = vld [vmem:[#allocation2 + $0x130] sm:$0xff]
    %v116 = vld [vmem:[#allocation2 + $0x138] sm:$0xff]
    %v117 = vld [vmem:[#allocation2 + $0x140] sm:$0xff]
    %v118 = vld [vmem:[#allocation2 + $0x148] sm:$0xff]
    %v119 = vld [vmem:[#allocation2 + $0x150] sm:$0xff]
    %v120 = vld [vmem:[#allocation2 + $0x158] sm:$0xff]
    %v121 = vld [vmem:[#allocation2 + $0x160] sm:$0xff]
    %v122 = vld [vmem:[#allocation2 + $0x168] sm:$0xff]
    %v123 = vld [vmem:[#allocation2 + $0x170] sm:$0xff]
    %v124 = vld [vmem:[#allocation2 + $0x178] sm:$0xff]
    %v125 = vld [vmem:[%s2 + $0x2] sm:$0x1]
    %v126 = vperm.slane %v125, 0
    %127 = vmatpush.msra.mxu0 %v124
    %128 = vmatpush.msra.mxu0 %v123
    %129 = vmatpush.msra.mxu0 %v122
    %130 = vmatpush.msra.mxu0 %v121
    %131 = vmatpush.msra.mxu0 %v120
    %132 = vmatpush.msra.mxu0 %v119
    %133 = vmatpush.msra.mxu0 %v118
    %134 = vmatpush.msra.mxu0 %v117
    %135 = vmatpush.msra.mxu0 %v116
    %136 = vmatpush.msra.mxu0 %v115
    %137 = vmatpush.msra.mxu0 %v114
    %138 = vmatpush.msra.mxu0 %v113
    %139 = vmatpush.msra.mxu0 %v112
    %140 = vmatpush.msra.mxu0 %v111
    %141 = vmatpush.msra.mxu0 %v110
    %142 = vmatpush.msra.mxu0 %v109
    %143 = vmatmul.f32.gmra.mxu0 %v108
    %v144 = vpop.f32.mrf.mxu0
    %v145 = vadd.f32 %v126, %v144
    %146 = vdwg.mxu0
    %v147 = vmax.f32 %v145, 0.0
    %v148 = vld [vmem:[#allocation2 + $0x180] sm:$0xff]
    %v149 = vld [vmem:[#allocation2 + $0x188] sm:$0xff]
    %v150 = vld [vmem:[#allocation2 + $0x190] sm:$0xff]
    %v151 = vld [vmem:[#allocation2 + $0x198] sm:$0xff]
    %v152 = vld [vmem:[#allocation2 + $0x1a0] sm:$0xff]
    %v153 = vld [vmem:[#allocation2 + $0x1a8] sm:$0xff]
    %v154 = vld [vmem:[#allocation2 + $0x1b0] sm:$0xff]
    %v155 = vld [vmem:[#allocation2 + $0x1b8] sm:$0xff]
    %v156 = vld [vmem:[#allocation2 + $0x1c0] sm:$0xff]
    %v157 = vld [vmem:[#allocation2 + $0x1c8] sm:$0xff]
    %v158 = vld [vmem:[#allocation2 + $0x1d0] sm:$0xff]
    %v159 = vld [vmem:[#allocation2 + $0x1d8] sm:$0xff]
    %v160 = vld [vmem:[#allocation2 + $0x1e0] sm:$0xff]
    %v161 = vld [vmem:[#allocation2 + $0x1e8] sm:$0xff]
    %v162 = vld [vmem:[#allocation2 + $0x1f0] sm:$0xff]
    %v163 = vld [vmem:[#allocation2 + $0x1f8] sm:$0xff]
    %v164 = vld [vmem:[%s2 + $0x3] sm:$0x1]
    %v165 = vperm.slane %v164, 0
    %166 = vmatpush.msra.mxu0 %v163
    %167 = vmatpush.msra.mxu0 %v162
    %168 = vmatpush.msra.mxu0 %v161
    %169 = vmatpush.msra.mxu0 %v160
    %170 = vmatpush.msra.mxu0 %v159
    %171 = vmatpush.msra.mxu0 %v158
    %172 = vmatpush.msra.mxu0 %v157
    %173 = vmatpush.msra.mxu0 %v156
    %174 = vmatpush.msra.mxu0 %v155
    %175 = vmatpush.msra.mxu0 %v154
    %176 = vmatpush.msra.mxu0 %v153
    %177 = vmatpush.msra.mxu0 %v152
    %178 = vmatpush.msra.mxu0 %v151
    %179 = vmatpush.msra.mxu0 %v150
    %180 = vmatpush.msra.mxu0 %v149
    %181 = vmatpush.msra.mxu0 %v148
    %182 = vmatmul.f32.gmra.mxu0 %v147
    %v183 = vpop.f32.mrf.mxu0
    %v184 = vadd.f32 %v165, %v183
    %185 = vdwg.mxu0
    %v186 = vmax.f32 %v184, 0.0
    %v187 = vld [vmem:[%s2 + $0x4] sm:$0x1]
    %v188 = vperm.slane %v187, 0
    %v189 = vmul.f32 %v186, %v188
    %190 = vadd.xlane.f32.xlu0 %v189
    %v191 = vpop.xlane.xlu0 %190
    %v192 = vlaneseq
    %v193 = vand.u32 %v192, 127
    %vm194 = vcmp.eq.s32.totalorder %v193, 32
    %v195 = vsel %vm194, %v191, 0.0
    %v196 = vadd.f32 %v106, %v195
    %197 = vst [vmem:[%s3] sm:$0xff] %v196
    // Predicated region
    $region18: #{_lambda_.1} parent=1 // pred_check
      _
    $region19: #{_lambda_.1} parent=1 // pred_check_branch
      %199 = sbr.rel (0) target = $region21
    $region20: #{_lambda_.1} parent=1 // pred_region
      _
    $region21: #{_lambda_.1} parent=1 // pred_fallthru
      _
    // Predicated region
    $region22: #{_lambda_.1} parent=1 // pred_check
      _
    $region23: #{_lambda_.1} parent=1 // pred_check_branch
      %201 = sbr.rel (0) target = $region25
    $region24: #{_lambda_.1} parent=1 // pred_region
      _
    $region25: #{_lambda_.1} parent=1 // pred_fallthru
      _
    %202 = vsyncpa [#allocation3], 1

</llo_original>
